<compile_context>
chip_gen: v7x
topology: tpu7x:2x2x1
jax: 0.10.0
libtpu: 0.0.40
codegen_flags: <defaults>
</compile_context>

<pallas_src>
import numpy as np

import jax
import jax.numpy as jnp
from jax import lax
from jax.experimental import pallas as pl
from jax.experimental.pallas import tpu as pltpu


# ----------------------------------------------------------------------------
# Fused Block kernel
# ----------------------------------------------------------------------------
def _make_block_kernel(N, H, W, C1, C2):
    Ho, Wo = H // 2, W // 2
    WC1, WC2 = W * C1, W * C2
    WoC2 = Wo * C2
    NH, NHo = N * H, N * Ho

    def _tree_sum(terms):
        while len(terms) > 1:
            nxt = [terms[i] + terms[i + 1] for i in range(0, len(terms) - 1, 2)]
            if len(terms) % 2:
                nxt.append(terms[-1])
            terms = nxt
        return terms[0]

    def kernel(x_ref, xs_ref, wdw1_ref, bigw1_ref, bias1_ref,
               wdw2_ref, bigw2_ref, bias2_ref, wsk_ref, skaff_ref,
               o_ref, x1p_ref, u1p_ref, mrow_ref):
        f32, bf16 = jnp.float32, jnp.bfloat16

        def dw3x3(xp, wdw, C, WC):
            # xp: (N, H+2, W*C) f32, rows 0 and H+1 are zero (H halo).  The W halo is built
            # here with a lane shift + zero fill so everything stays <= 128 lanes.
            zl = jnp.zeros((N, H + 2, C), f32)
            xm = jnp.concatenate([zl, xp[:, :, :WC - C]], axis=2)   # value at w-1 (0 at w=0)
            xq = jnp.concatenate([xp[:, :, C:], zl], axis=2)        # value at w+1 (0 at w=W-1)
            srcs = (xm, xp, xq)
            terms = []
            for dh in range(3):
                for dw in range(3):
                    k = 3 * dh + dw
                    terms.append(srcs[dw][:, dh:dh + H, :] * wdw[k:k + 1, :])
            return _tree_sum(terms)                                  # (N, H, W*C) f32

        # ---- unit 1: ReLU -> depthwise 3x3 -> [BN(C1) -> pointwise -> BN(C2)] folded ----
        x1p_ref[...] = jnp.zeros(x1p_ref.shape, f32)
        x1p_ref[:, 1:H + 1, :] = jnp.maximum(x_ref[...], 0.0)        # relu(0)=0 => halo stays valid
        acc1 = dw3x3(x1p_ref[...], wdw1_ref[...], C1, WC1)           # (N, H, WC1) f32
        u1 = jnp.dot(acc1.reshape(NH, WC1).astype(bf16), bigw1_ref[...],
                     preferred_element_type=f32) + bias1_ref[...]    # (NH, WC2) f32

        # ---- unit 2: ReLU -> depthwise 3x3 -> [BN(C2) -> pointwise -> BN(C2)] folded ----
        u1p_ref[...] = jnp.zeros(u1p_ref.shape, f32)
        u1p_ref[:, 1:H + 1, :] = jnp.maximum(u1, 0.0).reshape(N, H, WC2)
        acc2 = dw3x3(u1p_ref[...], wdw2_ref[...], C2, WC2)           # (N, H, WC2) f32
        # bigw2's columns are permuted to [even-w | odd-w] blocks so the stride-2 W pooling
        # below is two lane-block slices instead of a strided gather.
        p2 = jnp.dot(acc2.reshape(NH, WC2).astype(bf16), bigw2_ref[...],
                     preferred_element_type=f32) + bias2_ref[...]    # (NH, WC2) f32

        # ---- MaxPool(3, stride 2, pad 1): W direction (on permuted columns) ----
        ev = p2[:, :WoC2]                                            # u2 at w = 2*wo
        od = p2[:, WoC2:]                                            # u2 at w = 2*wo + 1
        odm1 = jnp.concatenate(
            [jnp.full((NH, C2), -jnp.inf, f32), od[:, :WoC2 - C2]], axis=1)  # u2 at w = 2*wo - 1
        mrow_ref[...] = jnp.maximum(jnp.maximum(ev, od), odm1)       # (NH, WoC2)

        # ---- MaxPool: H direction, vectorized via strided sublane reads ----
        r_even = mrow_ref[pl.ds(0, NHo, stride=2), :]                # rows (n, 2*ho)
        r_odd = mrow_ref[pl.ds(1, NHo, stride=2), :]                 # rows (n, 2*ho + 1)
        r_up = jnp.concatenate([r_odd[:1, :], r_odd[:NHo - 1, :]], axis=0)   # rows (n, 2*ho - 1)
        ho_is0 = (lax.broadcasted_iota(jnp.int32, (NHo, WoC2), 0) % Ho) == 0
        r_up = jnp.where(ho_is0, -jnp.inf, r_up)                     # -inf pad row at ho == 0
        pooled = jnp.maximum(jnp.maximum(r_even, r_odd), r_up)       # (NHo, WoC2)

        # ---- skip: 1x1 stride-2 conv -> ReLU -> BN, fused residual add ----
        sk = jnp.dot(xs_ref[...], wsk_ref[...], preferred_element_type=f32)  # (NHo, WoC2)
        sk = jnp.maximum(sk, 0.0) * skaff_ref[0:1, :] + skaff_ref[1:2, :]
        res = pooled + sk                                            # rows (n, ho)

        # ---- single lane-dense (Ho, N*Wo*C2) = (8, 128) output store ----
        o_ref[...] = jnp.concatenate(
            [res[n * Ho:(n + 1) * Ho, :] for n in range(N)], axis=1)

    return kernel


# ----------------------------------------------------------------------------
# Parameter folding / layout preparation (tiny weight-only ops, done once)
# ----------------------------------------------------------------------------
def prepare_params(p, H=16, W=16):
    C1 = p["w_dw1"].shape[-1]
    C2 = p["w_pw1"].shape[1]
    Wo = W // 2

    # depthwise taps tiled across w so they broadcast over the (W*C) lane axis
    wdw1 = jnp.tile(p["w_dw1"].reshape(9, C1), (1, W))                      # (9, W*C1) f32
    wdw2 = jnp.tile(p["w_dw2"].reshape(9, C2), (1, W))                      # (9, W*C2) f32

    # unit 1: fold BN(C1) -> pointwise -> BN(C2) into one block-diagonal matmul + bias
    B1 = p["dw1_scale"][:, None] * p["w_pw1"] * p["bn1_scale"][None, :]     # (C1, C2)
    b1 = (p["dw1_shift"] @ p["w_pw1"]) * p["bn1_scale"] + p["bn1_shift"]    # (C2,)
    bigw1 = jnp.kron(jnp.eye(W, dtype=jnp.float32), B1).astype(jnp.bfloat16)   # (W*C1, W*C2)
    bias1 = jnp.tile(b1, W)[None, :]                                        # (1, W*C2) f32

    # unit 2: same fold, output columns permuted into [even-w block | odd-w block]
    B2 = p["dw2_scale"][:, None] * p["w_pw2"] * p["bn2_scale"][None, :]     # (C2, C2)
    b2 = (p["dw2_shift"] @ p["w_pw2"]) * p["bn2_scale"] + p["bn2_shift"]    # (C2,)
    perm = np.concatenate([np.arange(C2) + w * C2
                           for w in list(range(0, W, 2)) + list(range(1, W, 2))])
    bigw2 = jnp.kron(jnp.eye(W, dtype=jnp.float32), B2)[:, perm].astype(jnp.bfloat16)  # (W*C2, W*C2)
    bias2 = jnp.tile(b2, W)[None, :]                                        # (1, W*C2)  (co = col % C2 in both halves)

    # skip: 1x1 stride-2 conv on the pre-strided (N*Ho, Wo*C1) input, plus folded BN affine
    wsk = jnp.kron(jnp.eye(Wo, dtype=jnp.float32), p["w_skip"]).astype(jnp.bfloat16)    # (Wo*C1, Wo*C2)
    skaff = jnp.stack([jnp.tile(p["skip_scale"], Wo), jnp.tile(p["skip_shift"], Wo)])   # (2, Wo*C2)

    return dict(wdw1=wdw1, bigw1=bigw1, bias1=bias1,
                wdw2=wdw2, bigw2=bigw2, bias2=bias2,
                wsk=wsk, skaff=skaff)


@jax.jit
def block_forward(x_nchw, prep):
    N, C1, H, W = x_nchw.shape
    C2 = prep["bigw1"].shape[1] // W
    Ho, Wo = H // 2, W // 2

    # lane-dense layout prep: NCHW -> (N, H, W*C1); skip input pre-strided to the 8x8 grid
    xk = jnp.transpose(x_nchw, (0, 2, 3, 1)).reshape(N, H, W * C1)
    xs = jnp.transpose(x_nchw[:, :, ::2, ::2], (0, 2, 3, 1)) \
            .reshape(N * Ho, Wo * C1).astype(jnp.bfloat16)

    out = pl.pallas_call(
        _make_block_kernel(N, H, W, C1, C2),
        out_shape=jax.ShapeDtypeStruct((Ho, N * Wo * C2), jnp.float32),
        in_specs=[pl.BlockSpec(memory_space=pltpu.MemorySpace.VMEM)] * 10,
        out_specs=pl.BlockSpec(memory_space=pltpu.MemorySpace.VMEM),
        scratch_shapes=[
            pltpu.VMEM((N, H + 2, W * C1), jnp.float32),   # H-padded ReLU'd input
            pltpu.VMEM((N, H + 2, W * C2), jnp.float32),   # H-padded unit-1 output
            pltpu.VMEM((N * H, Wo * C2), jnp.float32),     # W-pooled rows (for strided H pool)
        ],
    )(xk, xs, prep["wdw1"], prep["bigw1"], prep["bias1"],
      prep["wdw2"], prep["bigw2"], prep["bias2"], prep["wsk"], prep["skaff"])

    # (Ho, N*Wo*C2) with lane = n*Wo*C2 + wo*C2 + c  ->  NCHW
    return jnp.transpose(out.reshape(Ho, N, Wo, C2), (1, 3, 0, 2))


# ----------------------------------------------------------------------------
# Deterministic synthetic parameters (eval-mode BN folded to scale/shift)
# ----------------------------------------------------------------------------
def _bn_fold(key, c, eps=1e-5):
    k1, k2, k3, k4 = jax.random.split(key, 4)
    gamma = jax.random.uniform(k1, (c,), jnp.float32, 0.8, 1.2)
    beta = 0.05 * jax.random.normal(k2, (c,), jnp.float32)
    mean = 0.05 * jax.random.normal(k3, (c,), jnp.float32)
    var = jax.random.uniform(k4, (c,), jnp.float32, 0.5, 1.5)
    scale = gamma / jnp.sqrt(var + eps)
    shift = beta - mean * scale
    return scale, shift


def init_params(key, cin=4, cout=8):
    ks = jax.random.split(key, 10)
    p = {}
    p["w_dw1"] = 0.1 * jax.random.normal(ks[0], (3, 3, cin), jnp.float32)
    p["dw1_scale"], p["dw1_shift"] = _bn_fold(ks[1], cin)
    p["w_pw1"] = 0.1 * jax.random.normal(ks[2], (cin, cout), jnp.float32)
    p["bn1_scale"], p["bn1_shift"] = _bn_fold(ks[3], cout)
    p["w_dw2"] = 0.1 * jax.random.normal(ks[4], (3, 3, cout), jnp.float32)
    p["dw2_scale"], p["dw2_shift"] = _bn_fold(ks[5], cout)
    p["w_pw2"] = 0.1 * jax.random.normal(ks[6], (cout, cout), jnp.float32)
    p["bn2_scale"], p["bn2_shift"] = _bn_fold(ks[7], cout)
    p["w_skip"] = 0.1 * jax.random.normal(ks[8], (cin, cout), jnp.float32)
    p["skip_scale"], p["skip_shift"] = _bn_fold(ks[9], cout)
    return p


# ----------------------------------------------------------------------------
# Pure-JAX reference (lax conv / reduce_window) for correctness check
# ----------------------------------------------------------------------------
def reference_forward(x_nchw, p):
    x = jnp.transpose(x_nchw, (0, 2, 3, 1))

    def unit(v, wdw, s1, b1, wpw, s2, b2):
        v = jnp.maximum(v, 0.0)
        c = v.shape[-1]
        v = lax.conv_general_dilated(
            v, wdw.reshape(3, 3, 1, c), (1, 1), ((1, 1), (1, 1)),
            dimension_numbers=("NHWC", "HWIO", "NHWC"), feature_group_count=c)
        v = v * s1.reshape(1, 1, 1, -1) + b1.reshape(1, 1, 1, -1)
        v = jnp.dot(v, wpw)
        v = v * s2.reshape(1, 1, 1, -1) + b2.reshape(1, 1, 1, -1)
        return v

    u = unit(x, p["w_dw1"], p["dw1_scale"], p["dw1_shift"],
             p["w_pw1"], p["bn1_scale"], p["bn1_shift"])
    u = unit(u, p["w_dw2"], p["dw2_scale"], p["dw2_shift"],
             p["w_pw2"], p["bn2_scale"], p["bn2_shift"])
    rep = lax.reduce_window(u, -jnp.inf, lax.max, (1, 3, 3, 1), (1, 2, 2, 1),
                            ((0, 0), (1, 1), (1, 1), (0, 0)))
    xs = x[:, ::2, ::2, :]
    skip = jnp.maximum(jnp.dot(xs, p["w_skip"]), 0.0)
    skip = skip * p["skip_scale"].reshape(1, 1, 1, -1) + p["skip_shift"].reshape(1, 1, 1, -1)
    return jnp.transpose(rep + skip, (0, 3, 1, 2))


if __name__ == "__main__":
    key = jax.random.PRNGKey(0)
    kx, kp = jax.random.split(key)
    x = jax.random.normal(kx, (2, 4, 16, 16), jnp.float32)   # NCHW, like PyTorch
    params = init_params(kp, cin=4, cout=8)
    prep = prepare_params(params, H=16, W=16)

    out = block_forward(x, prep)
    out = jax.block_until_ready(out)
    assert out.shape == (2, 8, 8, 8), out.shape

    ref = reference_forward(x, params)
    err = float(jnp.max(jnp.abs(out - ref)))
    # bf16 MXU operands (f32 accumulation): allow a slightly looser tolerance than pure f32
    assert jnp.allclose(out, ref, atol=5e-3, rtol=5e-3), err

    print("KERNEL_OK")
</pallas_src>

<mosaic_0001>
module attributes {stable_mosaic.version = 11 : i64} {
  func.func @kernel(%arg0: memref<2x16x64xf32, #tpu.memory_space<vmem>>, %arg1: memref<16x32xbf16, #tpu.memory_space<vmem>>, %arg2: memref<9x64xf32, #tpu.memory_space<vmem>>, %arg3: memref<64x128xbf16, #tpu.memory_space<vmem>>, %arg4: memref<1x128xf32, #tpu.memory_space<vmem>>, %arg5: memref<9x128xf32, #tpu.memory_space<vmem>>, %arg6: memref<128x128xbf16, #tpu.memory_space<vmem>>, %arg7: memref<1x128xf32, #tpu.memory_space<vmem>>, %arg8: memref<32x64xbf16, #tpu.memory_space<vmem>>, %arg9: memref<2x64xf32, #tpu.memory_space<vmem>>, %arg10: memref<8x128xf32, #tpu.memory_space<vmem>>, %arg11: memref<2x18x64xf32, #tpu.memory_space<vmem>>, %arg12: memref<2x18x128xf32, #tpu.memory_space<vmem>>, %arg13: memref<32x64xf32, #tpu.memory_space<vmem>>) attributes {dimension_semantics = [], scalar_prefetch = 0 : i64, scratch_operands = 3 : i64, tpu.core_type = #tpu.core_type<tc>} {
    %cst = arith.constant 0.000000e+00 : f32
    %0 = vector.broadcast %cst : f32 to vector<2x18x64xf32>
    %c0 = arith.constant 0 : index
    %c0_0 = arith.constant 0 : index
    %c0_1 = arith.constant 0 : index
    %1 = vector.load %arg11[%c0, %c0_0, %c0_1] : memref<2x18x64xf32, #tpu.memory_space<vmem>>, vector<2x18x64xf32>
    tpu.vector_store %arg11[%c0, %c0_0, %c0_1], %0 {strides = array<i32>} : memref<2x18x64xf32, #tpu.memory_space<vmem>>, vector<2x18x64xf32>,
    %c0_2 = arith.constant 0 : index
    %c0_3 = arith.constant 0 : index
    %c0_4 = arith.constant 0 : index
    %2 = vector.load %arg0[%c0_2, %c0_3, %c0_4] : memref<2x16x64xf32, #tpu.memory_space<vmem>>, vector<2x16x64xf32>
    %cst_5 = arith.constant 0.000000e+00 : f32
    %3 = vector.broadcast %cst_5 : f32 to vector<2x16x64xf32>
    %4 = arith.maximumf %2, %3 : vector<2x16x64xf32>
    %c0_6 = arith.constant 0 : index
    %c1 = arith.constant 1 : index
    %c0_7 = arith.constant 0 : index
    %5 = vector.load %arg11[%c0_6, %c1, %c0_7] : memref<2x18x64xf32, #tpu.memory_space<vmem>>, vector<2x16x64xf32>
    tpu.vector_store %arg11[%c0_6, %c1, %c0_7], %4 {strides = array<i32>} : memref<2x18x64xf32, #tpu.memory_space<vmem>>, vector<2x16x64xf32>,
    %c0_8 = arith.constant 0 : index
    %c0_9 = arith.constant 0 : index
    %c0_10 = arith.constant 0 : index
    %6 = vector.load %arg11[%c0_8, %c0_9, %c0_10] : memref<2x18x64xf32, #tpu.memory_space<vmem>>, vector<2x18x64xf32>
    %c0_11 = arith.constant 0 : index
    %c0_12 = arith.constant 0 : index
    %7 = vector.load %arg2[%c0_11, %c0_12] : memref<9x64xf32, #tpu.memory_space<vmem>>, vector<9x64xf32>
    %cst_13 = arith.constant 0.000000e+00 : f32
    %8 = vector.broadcast %cst_13 : f32 to vector<2x18x4xf32>
    %9 = vector.extract_strided_slice %6 {offsets = [0, 0, 0], sizes = [2, 18, 60], strides = [1, 1, 1]} : vector<2x18x64xf32> to vector<2x18x60xf32>
    %10 = tpu.concatenate %8, %9 in 2 : vector<2x18x4xf32>, vector<2x18x60xf32> -> vector<2x18x64xf32>
    %11 = vector.extract_strided_slice %6 {offsets = [0, 0, 4], sizes = [2, 18, 60], strides = [1, 1, 1]} : vector<2x18x64xf32> to vector<2x18x60xf32>
    %12 = tpu.concatenate %11, %8 in 2 : vector<2x18x60xf32>, vector<2x18x4xf32> -> vector<2x18x64xf32>
    %13 = vector.extract_strided_slice %10 {offsets = [0, 0, 0], sizes = [2, 16, 64], strides = [1, 1, 1]} : vector<2x18x64xf32> to vector<2x16x64xf32>
    %14 = vector.extract_strided_slice %7 {offsets = [0, 0], sizes = [1, 64], strides = [1, 1]} : vector<9x64xf32> to vector<1x64xf32>
    %15 = vector.shape_cast %14 : vector<1x64xf32> to vector<1x1x64xf32>
    %16 = vector.broadcast %15 : vector<1x1x64xf32> to vector<2x16x64xf32>
    %17 = arith.mulf %13, %16 : vector<2x16x64xf32>
    %18 = vector.extract_strided_slice %6 {offsets = [0, 0, 0], sizes = [2, 16, 64], strides = [1, 1, 1]} : vector<2x18x64xf32> to vector<2x16x64xf32>
    %19 = vector.extract_strided_slice %7 {offsets = [1, 0], sizes = [1, 64], strides = [1, 1]} : vector<9x64xf32> to vector<1x64xf32>
    %20 = vector.shape_cast %19 : vector<1x64xf32> to vector<1x1x64xf32>
    %21 = vector.broadcast %20 : vector<1x1x64xf32> to vector<2x16x64xf32>
    %22 = arith.mulf %18, %21 : vector<2x16x64xf32>
    %23 = vector.extract_strided_slice %12 {offsets = [0, 0, 0], sizes = [2, 16, 64], strides = [1, 1, 1]} : vector<2x18x64xf32> to vector<2x16x64xf32>
    %24 = vector.extract_strided_slice %7 {offsets = [2, 0], sizes = [1, 64], strides = [1, 1]} : vector<9x64xf32> to vector<1x64xf32>
    %25 = vector.shape_cast %24 : vector<1x64xf32> to vector<1x1x64xf32>
    %26 = vector.broadcast %25 : vector<1x1x64xf32> to vector<2x16x64xf32>
    %27 = arith.mulf %23, %26 : vector<2x16x64xf32>
    %28 = vector.extract_strided_slice %10 {offsets = [0, 1, 0], sizes = [2, 16, 64], strides = [1, 1, 1]} : vector<2x18x64xf32> to vector<2x16x64xf32>
    %29 = vector.extract_strided_slice %7 {offsets = [3, 0], sizes = [1, 64], strides = [1, 1]} : vector<9x64xf32> to vector<1x64xf32>
    %30 = vector.shape_cast %29 : vector<1x64xf32> to vector<1x1x64xf32>
    %31 = vector.broadcast %30 : vector<1x1x64xf32> to vector<2x16x64xf32>
    %32 = arith.mulf %28, %31 : vector<2x16x64xf32>
    %33 = vector.extract_strided_slice %6 {offsets = [0, 1, 0], sizes = [2, 16, 64], strides = [1, 1, 1]} : vector<2x18x64xf32> to vector<2x16x64xf32>
    %34 = vector.extract_strided_slice %7 {offsets = [4, 0], sizes = [1, 64], strides = [1, 1]} : vector<9x64xf32> to vector<1x64xf32>
    %35 = vector.shape_cast %34 : vector<1x64xf32> to vector<1x1x64xf32>
    %36 = vector.broadcast %35 : vector<1x1x64xf32> to vector<2x16x64xf32>
    %37 = arith.mulf %33, %36 : vector<2x16x64xf32>
    %38 = vector.extract_strided_slice %12 {offsets = [0, 1, 0], sizes = [2, 16, 64], strides = [1, 1, 1]} : vector<2x18x64xf32> to vector<2x16x64xf32>
    %39 = vector.extract_strided_slice %7 {offsets = [5, 0], sizes = [1, 64], strides = [1, 1]} : vector<9x64xf32> to vector<1x64xf32>
    %40 = vector.shape_cast %39 : vector<1x64xf32> to vector<1x1x64xf32>
    %41 = vector.broadcast %40 : vector<1x1x64xf32> to vector<2x16x64xf32>
    %42 = arith.mulf %38, %41 : vector<2x16x64xf32>
    %43 = vector.extract_strided_slice %10 {offsets = [0, 2, 0], sizes = [2, 16, 64], strides = [1, 1, 1]} : vector<2x18x64xf32> to vector<2x16x64xf32>
    %44 = vector.extract_strided_slice %7 {offsets = [6, 0], sizes = [1, 64], strides = [1, 1]} : vector<9x64xf32> to vector<1x64xf32>
    %45 = vector.shape_cast %44 : vector<1x64xf32> to vector<1x1x64xf32>
    %46 = vector.broadcast %45 : vector<1x1x64xf32> to vector<2x16x64xf32>
    %47 = arith.mulf %43, %46 : vector<2x16x64xf32>
    %48 = vector.extract_strided_slice %6 {offsets = [0, 2, 0], sizes = [2, 16, 64], strides = [1, 1, 1]} : vector<2x18x64xf32> to vector<2x16x64xf32>
    %49 = vector.extract_strided_slice %7 {offsets = [7, 0], sizes = [1, 64], strides = [1, 1]} : vector<9x64xf32> to vector<1x64xf32>
    %50 = vector.shape_cast %49 : vector<1x64xf32> to vector<1x1x64xf32>
    %51 = vector.broadcast %50 : vector<1x1x64xf32> to vector<2x16x64xf32>
    %52 = arith.mulf %48, %51 : vector<2x16x64xf32>
    %53 = vector.extract_strided_slice %12 {offsets = [0, 2, 0], sizes = [2, 16, 64], strides = [1, 1, 1]} : vector<2x18x64xf32> to vector<2x16x64xf32>
    %54 = vector.extract_strided_slice %7 {offsets = [8, 0], sizes = [1, 64], strides = [1, 1]} : vector<9x64xf32> to vector<1x64xf32>
    %55 = vector.shape_cast %54 : vector<1x64xf32> to vector<1x1x64xf32>
    %56 = vector.broadcast %55 : vector<1x1x64xf32> to vector<2x16x64xf32>
    %57 = arith.mulf %53, %56 : vector<2x16x64xf32>
    %58 = arith.addf %17, %22 : vector<2x16x64xf32>
    %59 = arith.addf %27, %32 : vector<2x16x64xf32>
    %60 = arith.addf %37, %42 : vector<2x16x64xf32>
    %61 = arith.addf %47, %52 : vector<2x16x64xf32>
    %62 = arith.addf %58, %59 : vector<2x16x64xf32>
    %63 = arith.addf %60, %61 : vector<2x16x64xf32>
    %64 = arith.addf %62, %63 : vector<2x16x64xf32>
    %65 = arith.addf %64, %57 : vector<2x16x64xf32>
    %66 = vector.shape_cast %65 : vector<2x16x64xf32> to vector<32x64xf32>
    %67 = arith.truncf %66 : vector<32x64xf32> to vector<32x64xbf16>
    %c0_14 = arith.constant 0 : index
    %c0_15 = arith.constant 0 : index
    %68 = vector.load %arg3[%c0_14, %c0_15] : memref<64x128xbf16, #tpu.memory_space<vmem>>, vector<64x128xbf16>
    %cst_16 = arith.constant dense<0.000000e+00> : vector<32x128xf32>
    %69 = tpu.matmul %67, %68, %cst_16 {dimension_numbers = #tpu.dot_dimension_numbers<[1], [0], [0], [1], [0, 0, 1, 1], [], []>} : vector<32x64xbf16>, vector<64x128xbf16>, vector<32x128xf32> -> vector<32x128xf32>
    %c0_17 = arith.constant 0 : index
    %c0_18 = arith.constant 0 : index
    %70 = vector.load %arg4[%c0_17, %c0_18] : memref<1x128xf32, #tpu.memory_space<vmem>>, vector<1x128xf32>
    %71 = vector.broadcast %70 : vector<1x128xf32> to vector<32x128xf32>
    %72 = arith.addf %69, %71 : vector<32x128xf32>
    %cst_19 = arith.constant 0.000000e+00 : f32
    %73 = vector.broadcast %cst_19 : f32 to vector<2x18x128xf32>
    %c0_20 = arith.constant 0 : index
    %c0_21 = arith.constant 0 : index
    %c0_22 = arith.constant 0 : index
    %74 = vector.load %arg12[%c0_20, %c0_21, %c0_22] : memref<2x18x128xf32, #tpu.memory_space<vmem>>, vector<2x18x128xf32>
    tpu.vector_store %arg12[%c0_20, %c0_21, %c0_22], %73 {strides = array<i32>} : memref<2x18x128xf32, #tpu.memory_space<vmem>>, vector<2x18x128xf32>,
    %cst_23 = arith.constant 0.000000e+00 : f32
    %75 = vector.broadcast %cst_23 : f32 to vector<32x128xf32>
    %76 = arith.maximumf %72, %75 : vector<32x128xf32>
    %77 = vector.shape_cast %76 : vector<32x128xf32> to vector<2x16x128xf32>
    %c0_24 = arith.constant 0 : index
    %c1_25 = arith.constant 1 : index
    %c0_26 = arith.constant 0 : index
    %78 = vector.load %arg12[%c0_24, %c1_25, %c0_26] : memref<2x18x128xf32, #tpu.memory_space<vmem>>, vector<2x16x128xf32>
    tpu.vector_store %arg12[%c0_24, %c1_25, %c0_26], %77 {strides = array<i32>} : memref<2x18x128xf32, #tpu.memory_space<vmem>>, vector<2x16x128xf32>,
    %c0_27 = arith.constant 0 : index
    %c0_28 = arith.constant 0 : index
    %c0_29 = arith.constant 0 : index
    %79 = vector.load %arg12[%c0_27, %c0_28, %c0_29] : memref<2x18x128xf32, #tpu.memory_space<vmem>>, vector<2x18x128xf32>
    %c0_30 = arith.constant 0 : index
    %c0_31 = arith.constant 0 : index
    %80 = vector.load %arg5[%c0_30, %c0_31] : memref<9x128xf32, #tpu.memory_space<vmem>>, vector<9x128xf32>
    %cst_32 = arith.constant 0.000000e+00 : f32
    %81 = vector.broadcast %cst_32 : f32 to vector<2x18x8xf32>
    %82 = vector.extract_strided_slice %79 {offsets = [0, 0, 0], sizes = [2, 18, 120], strides = [1, 1, 1]} : vector<2x18x128xf32> to vector<2x18x120xf32>
    %83 = tpu.concatenate %81, %82 in 2 : vector<2x18x8xf32>, vector<2x18x120xf32> -> vector<2x18x128xf32>
    %84 = vector.extract_strided_slice %79 {offsets = [0, 0, 8], sizes = [2, 18, 120], strides = [1, 1, 1]} : vector<2x18x128xf32> to vector<2x18x120xf32>
    %85 = tpu.concatenate %84, %81 in 2 : vector<2x18x120xf32>, vector<2x18x8xf32> -> vector<2x18x128xf32>
    %86 = vector.extract_strided_slice %83 {offsets = [0, 0, 0], sizes = [2, 16, 128], strides = [1, 1, 1]} : vector<2x18x128xf32> to vector<2x16x128xf32>
    %87 = vector.extract_strided_slice %80 {offsets = [0, 0], sizes = [1, 128], strides = [1, 1]} : vector<9x128xf32> to vector<1x128xf32>
    %88 = vector.shape_cast %87 : vector<1x128xf32> to vector<1x1x128xf32>
    %89 = vector.broadcast %88 : vector<1x1x128xf32> to vector<2x16x128xf32>
    %90 = arith.mulf %86, %89 : vector<2x16x128xf32>
    %91 = vector.extract_strided_slice %79 {offsets = [0, 0, 0], sizes = [2, 16, 128], strides = [1, 1, 1]} : vector<2x18x128xf32> to vector<2x16x128xf32>
    %92 = vector.extract_strided_slice %80 {offsets = [1, 0], sizes = [1, 128], strides = [1, 1]} : vector<9x128xf32> to vector<1x128xf32>
    %93 = vector.shape_cast %92 : vector<1x128xf32> to vector<1x1x128xf32>
    %94 = vector.broadcast %93 : vector<1x1x128xf32> to vector<2x16x128xf32>
    %95 = arith.mulf %91, %94 : vector<2x16x128xf32>
    %96 = vector.extract_strided_slice %85 {offsets = [0, 0, 0], sizes = [2, 16, 128], strides = [1, 1, 1]} : vector<2x18x128xf32> to vector<2x16x128xf32>
    %97 = vector.extract_strided_slice %80 {offsets = [2, 0], sizes = [1, 128], strides = [1, 1]} : vector<9x128xf32> to vector<1x128xf32>
    %98 = vector.shape_cast %97 : vector<1x128xf32> to vector<1x1x128xf32>
    %99 = vector.broadcast %98 : vector<1x1x128xf32> to vector<2x16x128xf32>
    %100 = arith.mulf %96, %99 : vector<2x16x128xf32>
    %101 = vector.extract_strided_slice %83 {offsets = [0, 1, 0], sizes = [2, 16, 128], strides = [1, 1, 1]} : vector<2x18x128xf32> to vector<2x16x128xf32>
    %102 = vector.extract_strided_slice %80 {offsets = [3, 0], sizes = [1, 128], strides = [1, 1]} : vector<9x128xf32> to vector<1x128xf32>
    %103 = vector.shape_cast %102 : vector<1x128xf32> to vector<1x1x128xf32>
    %104 = vector.broadcast %103 : vector<1x1x128xf32> to vector<2x16x128xf32>
    %105 = arith.mulf %101, %104 : vector<2x16x128xf32>
    %106 = vector.extract_strided_slice %79 {offsets = [0, 1, 0], sizes = [2, 16, 128], strides = [1, 1, 1]} : vector<2x18x128xf32> to vector<2x16x128xf32>
    %107 = vector.extract_strided_slice %80 {offsets = [4, 0], sizes = [1, 128], strides = [1, 1]} : vector<9x128xf32> to vector<1x128xf32>
    %108 = vector.shape_cast %107 : vector<1x128xf32> to vector<1x1x128xf32>
    %109 = vector.broadcast %108 : vector<1x1x128xf32> to vector<2x16x128xf32>
    %110 = arith.mulf %106, %109 : vector<2x16x128xf32>
    %111 = vector.extract_strided_slice %85 {offsets = [0, 1, 0], sizes = [2, 16, 128], strides = [1, 1, 1]} : vector<2x18x128xf32> to vector<2x16x128xf32>
    %112 = vector.extract_strided_slice %80 {offsets = [5, 0], sizes = [1, 128], strides = [1, 1]} : vector<9x128xf32> to vector<1x128xf32>
    %113 = vector.shape_cast %112 : vector<1x128xf32> to vector<1x1x128xf32>
    %114 = vector.broadcast %113 : vector<1x1x128xf32> to vector<2x16x128xf32>
    %115 = arith.mulf %111, %114 : vector<2x16x128xf32>
    %116 = vector.extract_strided_slice %83 {offsets = [0, 2, 0], sizes = [2, 16, 128], strides = [1, 1, 1]} : vector<2x18x128xf32> to vector<2x16x128xf32>
    %117 = vector.extract_strided_slice %80 {offsets = [6, 0], sizes = [1, 128], strides = [1, 1]} : vector<9x128xf32> to vector<1x128xf32>
    %118 = vector.shape_cast %117 : vector<1x128xf32> to vector<1x1x128xf32>
    %119 = vector.broadcast %118 : vector<1x1x128xf32> to vector<2x16x128xf32>
    %120 = arith.mulf %116, %119 : vector<2x16x128xf32>
    %121 = vector.extract_strided_slice %79 {offsets = [0, 2, 0], sizes = [2, 16, 128], strides = [1, 1, 1]} : vector<2x18x128xf32> to vector<2x16x128xf32>
    %122 = vector.extract_strided_slice %80 {offsets = [7, 0], sizes = [1, 128], strides = [1, 1]} : vector<9x128xf32> to vector<1x128xf32>
    %123 = vector.shape_cast %122 : vector<1x128xf32> to vector<1x1x128xf32>
    %124 = vector.broadcast %123 : vector<1x1x128xf32> to vector<2x16x128xf32>
    %125 = arith.mulf %121, %124 : vector<2x16x128xf32>
    %126 = vector.extract_strided_slice %85 {offsets = [0, 2, 0], sizes = [2, 16, 128], strides = [1, 1, 1]} : vector<2x18x128xf32> to vector<2x16x128xf32>
    %127 = vector.extract_strided_slice %80 {offsets = [8, 0], sizes = [1, 128], strides = [1, 1]} : vector<9x128xf32> to vector<1x128xf32>
    %128 = vector.shape_cast %127 : vector<1x128xf32> to vector<1x1x128xf32>
    %129 = vector.broadcast %128 : vector<1x1x128xf32> to vector<2x16x128xf32>
    %130 = arith.mulf %126, %129 : vector<2x16x128xf32>
    %131 = arith.addf %90, %95 : vector<2x16x128xf32>
    %132 = arith.addf %100, %105 : vector<2x16x128xf32>
    %133 = arith.addf %110, %115 : vector<2x16x128xf32>
    %134 = arith.addf %120, %125 : vector<2x16x128xf32>
    %135 = arith.addf %131, %132 : vector<2x16x128xf32>
    %136 = arith.addf %133, %134 : vector<2x16x128xf32>
    %137 = arith.addf %135, %136 : vector<2x16x128xf32>
    %138 = arith.addf %137, %130 : vector<2x16x128xf32>
    %139 = vector.shape_cast %138 : vector<2x16x128xf32> to vector<32x128xf32>
    %140 = arith.truncf %139 : vector<32x128xf32> to vector<32x128xbf16>
    %c0_33 = arith.constant 0 : index
    %c0_34 = arith.constant 0 : index
    %141 = vector.load %arg6[%c0_33, %c0_34] : memref<128x128xbf16, #tpu.memory_space<vmem>>, vector<128x128xbf16>
    %cst_35 = arith.constant dense<0.000000e+00> : vector<32x128xf32>
    %142 = tpu.matmul %140, %141, %cst_35 {dimension_numbers = #tpu.dot_dimension_numbers<[1], [0], [0], [1], [0, 0, 1, 1], [], []>} : vector<32x128xbf16>, vector<128x128xbf16>, vector<32x128xf32> -> vector<32x128xf32>
    %c0_36 = arith.constant 0 : index
    %c0_37 = arith.constant 0 : index
    %143 = vector.load %arg7[%c0_36, %c0_37] : memref<1x128xf32, #tpu.memory_space<vmem>>, vector<1x128xf32>
    %144 = vector.broadcast %143 : vector<1x128xf32> to vector<32x128xf32>
    %145 = arith.addf %142, %144 : vector<32x128xf32>
    %146 = vector.extract_strided_slice %145 {offsets = [0, 0], sizes = [32, 64], strides = [1, 1]} : vector<32x128xf32> to vector<32x64xf32>
    %147 = vector.extract_strided_slice %145 {offsets = [0, 64], sizes = [32, 64], strides = [1, 1]} : vector<32x128xf32> to vector<32x64xf32>
    %cst_38 = arith.constant 0xFF800000 : f32
    %148 = vector.broadcast %cst_38 : f32 to vector<32x8xf32>
    %149 = vector.extract_strided_slice %147 {offsets = [0, 0], sizes = [32, 56], strides = [1, 1]} : vector<32x64xf32> to vector<32x56xf32>
    %150 = tpu.concatenate %148, %149 in 1 : vector<32x8xf32>, vector<32x56xf32> -> vector<32x64xf32>
    %151 = arith.maximumf %146, %147 : vector<32x64xf32>
    %152 = arith.maximumf %151, %150 : vector<32x64xf32>
    %c0_39 = arith.constant 0 : index
    %c0_40 = arith.constant 0 : index
    %153 = vector.load %arg13[%c0_39, %c0_40] : memref<32x64xf32, #tpu.memory_space<vmem>>, vector<32x64xf32>
    tpu.vector_store %arg13[%c0_39, %c0_40], %152 {strides = array<i32>} : memref<32x64xf32, #tpu.memory_space<vmem>>, vector<32x64xf32>,
    %c0_41 = arith.constant 0 : index
    %c0_42 = arith.constant 0 : index
    %154 = tpu.strided_load %arg13[%c0_41, %c0_42] {strides = array<i32: 2, 1>} : memref<32x64xf32, #tpu.memory_space<vmem>>, vector<16x64xf32>
    %c1_43 = arith.constant 1 : index
    %c0_44 = arith.constant 0 : index
    %155 = tpu.strided_load %arg13[%c1_43, %c0_44] {strides = array<i32: 2, 1>} : memref<32x64xf32, #tpu.memory_space<vmem>>, vector<16x64xf32>
    %156 = vector.extract_strided_slice %155 {offsets = [0, 0], sizes = [1, 64], strides = [1, 1]} : vector<16x64xf32> to vector<1x64xf32>
    %157 = vector.extract_strided_slice %155 {offsets = [0, 0], sizes = [15, 64], strides = [1, 1]} : vector<16x64xf32> to vector<15x64xf32>
    %158 = tpu.concatenate %156, %157 in 0 : vector<1x64xf32>, vector<15x64xf32> -> vector<16x64xf32>
    %159 = tpu.iota {dimensions = array<i32: 0>} : vector<16x64xi32>
    %c8_i32 = arith.constant 8 : i32
    %c0_i32 = arith.constant 0 : i32
    %160 = arith.cmpi eq, %c8_i32, %c0_i32 : i32
    %c1_i32 = arith.constant 1 : i32
    %161 = arith.select %160, %c1_i32, %c8_i32 : i32
    %162 = vector.broadcast %161 : i32 to vector<16x64xi32>
    %163 = arith.remsi %159, %162 : vector<16x64xi32>
    %c0_i32_45 = arith.constant 0 : i32
    %164 = vector.broadcast %c0_i32_45 : i32 to vector<16x64xi32>
    %165 = arith.cmpi ne, %163, %164 : vector<16x64xi32>
    %c0_i32_46 = arith.constant 0 : i32
    %166 = vector.broadcast %c0_i32_46 : i32 to vector<16x64xi32>
    %167 = arith.cmpi slt, %163, %166 : vector<16x64xi32>
    %c0_i32_47 = arith.constant 0 : i32
    %168 = arith.cmpi slt, %161, %c0_i32_47 : i32
    %169 = vector.broadcast %168 : i1 to vector<16x64xi1>
    %170 = vector.broadcast %169 : vector<16x64xi1> to vector<16x64xi1>
    %171 = arith.xori %167, %170 : vector<16x64xi1>
    %172 = arith.andi %171, %165 : vector<16x64xi1>
    %173 = vector.broadcast %161 : i32 to vector<16x64xi32>
    %174 = arith.addi %163, %173 : vector<16x64xi32>
    %175 = arith.select %172, %174, %163 : vector<16x64xi1>, vector<16x64xi32>
    %c0_i32_48 = arith.constant 0 : i32
    %176 = vector.broadcast %c0_i32_48 : i32 to vector<16x64xi32>
    %177 = arith.cmpi eq, %175, %176 : vector<16x64xi32>
    %cst_49 = arith.constant 0xFF800000 : f32
    %178 = vector.broadcast %cst_49 : f32 to vector<16x64xf32>
    %179 = arith.select %177, %178, %158 : vector<16x64xi1>, vector<16x64xf32>
    %180 = arith.maximumf %154, %155 : vector<16x64xf32>
    %181 = arith.maximumf %180, %179 : vector<16x64xf32>
    %c0_50 = arith.constant 0 : index
    %c0_51 = arith.constant 0 : index
    %182 = vector.load %arg1[%c0_50, %c0_51] : memref<16x32xbf16, #tpu.memory_space<vmem>>, vector<16x32xbf16>
    %c0_52 = arith.constant 0 : index
    %c0_53 = arith.constant 0 : index
    %183 = vector.load %arg8[%c0_52, %c0_53] : memref<32x64xbf16, #tpu.memory_space<vmem>>, vector<32x64xbf16>
    %cst_54 = arith.constant dense<0.000000e+00> : vector<16x64xf32>
    %184 = tpu.matmul %182, %183, %cst_54 {dimension_numbers = #tpu.dot_dimension_numbers<[1], [0], [0], [1], [0, 0, 1, 1], [], []>} : vector<16x32xbf16>, vector<32x64xbf16>, vector<16x64xf32> -> vector<16x64xf32>
    %cst_55 = arith.constant 0.000000e+00 : f32
    %185 = vector.broadcast %cst_55 : f32 to vector<16x64xf32>
    %186 = arith.maximumf %184, %185 : vector<16x64xf32>
    %c0_56 = arith.constant 0 : index
    %c0_57 = arith.constant 0 : index
    %187 = vector.load %arg9[%c0_56, %c0_57] : memref<2x64xf32, #tpu.memory_space<vmem>>, vector<1x64xf32>
    %188 = vector.broadcast %187 : vector<1x64xf32> to vector<16x64xf32>
    %189 = arith.mulf %186, %188 : vector<16x64xf32>
    %c1_58 = arith.constant 1 : index
    %c0_59 = arith.constant 0 : index
    %190 = vector.load %arg9[%c1_58, %c0_59] : memref<2x64xf32, #tpu.memory_space<vmem>>, vector<1x64xf32>
    %191 = vector.broadcast %190 : vector<1x64xf32> to vector<16x64xf32>
    %192 = arith.addf %189, %191 : vector<16x64xf32>
    %193 = arith.addf %181, %192 : vector<16x64xf32>
    %194 = vector.extract_strided_slice %193 {offsets = [0, 0], sizes = [8, 64], strides = [1, 1]} : vector<16x64xf32> to vector<8x64xf32>
    %195 = vector.extract_strided_slice %193 {offsets = [8, 0], sizes = [8, 64], strides = [1, 1]} : vector<16x64xf32> to vector<8x64xf32>
    %196 = tpu.concatenate %194, %195 in 1 : vector<8x64xf32>, vector<8x64xf32> -> vector<8x128xf32>
    %c0_60 = arith.constant 0 : index
    %c0_61 = arith.constant 0 : index
    %197 = vector.load %arg10[%c0_60, %c0_61] : memref<8x128xf32, #tpu.memory_space<vmem>>, vector<8x128xf32>
    tpu.vector_store %arg10[%c0_60, %c0_61], %196 {strides = array<i32>} : memref<8x128xf32, #tpu.memory_space<vmem>>, vector<8x128xf32>,
    return
  }
}

</mosaic_0001>

<llo_original>
// kernel: block_forward.1
$region0: #{block_forward.1}
  #allocation0 [shape = 'u32[]', space=smem, size = 0x4, offset = 0x4, fixed_abs, tag = 'smem constant byte address 0x4 - core index']
  #allocation1 [shape = 'u32[144,128]{1,0:T(1,128)}', space=vmem, size = 0x12000, scoped, tag = 'internal scratch']
  #allocation2 [shape = 'f32[2,18,64]{2,1,0:T(8,128)}', space=vmem, size = 0x6000, scoped, tag = 'scratch operand']
  #allocation3 [shape = 'f32[2,18,128]{2,1,0:T(8,128)}', space=vmem, size = 0x6000, scoped, tag = 'scratch operand']
  #allocation4 [shape = 'f32[32,64]{1,0:T(8,128)}', space=vmem, size = 0x4000, scoped, tag = 'scratch operand']
  %s0 = inlined_call_operand.vmem [shape: f32[2,16,64], index: 0, kind: input, shape index: {}]
  %s1 = inlined_call_operand.vmem [shape: bf16[16,32], index: 1, kind: input, shape index: {}]
  %s2 = inlined_call_operand.vmem [shape: f32[9,64], index: 2, kind: input, shape index: {}]
  %s3 = inlined_call_operand.vmem [shape: bf16[64,128], index: 3, kind: input, shape index: {}]
  %s4 = inlined_call_operand.vmem [shape: f32[1,128], index: 4, kind: input, shape index: {}]
  %s5 = inlined_call_operand.vmem [shape: f32[9,128], index: 5, kind: input, shape index: {}]
  %s6 = inlined_call_operand.vmem [shape: bf16[128,128], index: 6, kind: input, shape index: {}]
  %s7 = inlined_call_operand.vmem [shape: f32[1,128], index: 7, kind: input, shape index: {}]
  %s8 = inlined_call_operand.vmem [shape: bf16[32,64], index: 8, kind: input, shape index: {}]
  %s9 = inlined_call_operand.vmem [shape: f32[2,64], index: 9, kind: input, shape index: {}]
  %s10 = inlined_call_operand.vmem [shape: f32[8,128], index: 10, kind: output, shape index: {}]
  %s11 = sld [smem:[#allocation0]]
  $region50: #{block_forward.1} parent=0
    _
  %s13 = ssub.s32 1, %s11
  %s14 = scalar_select 0, %s13, %s11
  // Predicated region
  $region2: #{block_forward.1} parent=0 // pred_check
    _
  $region3: #{block_forward.1} parent=0 // pred_check_branch
    %16 = sbr.rel (0) target = $region5
  $region4: #{block_forward.1} parent=0 // pred_region
    _
  $region5: #{block_forward.1} parent=0 // pred_fallthru
    _
  // Predicated region
  $region6: #{block_forward.1} parent=0 // pred_check
    _
  $region7: #{block_forward.1} parent=0 // pred_check_branch
    %18 = sbr.rel (0) target = $region9
  $region8: #{block_forward.1} parent=0 // pred_region
    _
  $region9: #{block_forward.1} parent=0 // pred_fallthru
    _
  // Predicated region
  $region10: #{block_forward.1} parent=0 // pred_check
    _
  $region11: #{block_forward.1} parent=0 // pred_check_branch
    %20 = sbr.rel (0) target = $region13
  $region12: #{block_forward.1} parent=0 // pred_region
    _
  $region13: #{block_forward.1} parent=0 // pred_fallthru
    _
  // Predicated region
  $region14: #{block_forward.1} parent=0 // pred_check
    _
  $region15: #{block_forward.1} parent=0 // pred_check_branch
    %22 = sbr.rel (0) target = $region17
  $region16: #{block_forward.1} parent=0 // pred_region
    _
  $region17: #{block_forward.1} parent=0 // pred_fallthru
    _
  // Predicated region
  $region18: #{block_forward.1} parent=0 // pred_check
    _
  $region19: #{block_forward.1} parent=0 // pred_check_branch
    %24 = sbr.rel (0) target = $region21
  $region20: #{block_forward.1} parent=0 // pred_region
    _
  $region21: #{block_forward.1} parent=0 // pred_fallthru
    _
  // Predicated region
  $region22: #{block_forward.1} parent=0 // pred_check
    _
  $region23: #{block_forward.1} parent=0 // pred_check_branch
    %26 = sbr.rel (0) target = $region25
  $region24: #{block_forward.1} parent=0 // pred_region
    _
  $region25: #{block_forward.1} parent=0 // pred_fallthru
    _
  // Predicated region
  $region26: #{block_forward.1} parent=0 // pred_check
    _
  $region27: #{block_forward.1} parent=0 // pred_check_branch
    %28 = sbr.rel (0) target = $region29
  $region28: #{block_forward.1} parent=0 // pred_region
    _
  $region29: #{block_forward.1} parent=0 // pred_fallthru
    _
  // Predicated region
  $region30: #{block_forward.1} parent=0 // pred_check
    _
  $region31: #{block_forward.1} parent=0 // pred_check_branch
    %30 = sbr.rel (0) target = $region33
  $region32: #{block_forward.1} parent=0 // pred_region
    _
  $region33: #{block_forward.1} parent=0 // pred_fallthru
    _
  // Predicated region
  $region34: #{block_forward.1} parent=0 // pred_check
    _
  $region35: #{block_forward.1} parent=0 // pred_check_branch
    %32 = sbr.rel (0) target = $region37
  $region36: #{block_forward.1} parent=0 // pred_region
    _
  $region37: #{block_forward.1} parent=0 // pred_fallthru
    _
  // Predicated region
  $region38: #{block_forward.1} parent=0 // pred_check
    _
  $region39: #{block_forward.1} parent=0 // pred_check_branch
    %34 = sbr.rel (0) target = $region41
  $region40: #{block_forward.1} parent=0 // pred_region
    _
  $region41: #{block_forward.1} parent=0 // pred_fallthru
    _
  %vm36 = vcmask 523264
  %37 = vst.msk [vmem:[#allocation2] sm:$0xff] %vm36, 0.0
  %38 = vst.msk [vmem:[#allocation2 + $0x8] sm:$0xff] %vm36, 0.0
  %vm39 = vcmask 517120
  %40 = vst.msk [vmem:[#allocation2 + $0x10] sm:$0x3] %vm39, 0.0
  %41 = vst.msk [vmem:[#allocation2 + $0x18] sm:$0xff] %vm36, 0.0
  %42 = vst.msk [vmem:[#allocation2 + $0x20] sm:$0xff] %vm36, 0.0
  %43 = vst.msk [vmem:[#allocation2 + $0x28] sm:$0x3] %vm39, 0.0
  %v44 = vld [vmem:[%s0] sm:$0xff]
  %v45 = vld [vmem:[%s0 + $0x8] sm:$0xff]
  %v46 = vld [vmem:[%s0 + $0x10] sm:$0xff]
  %v47 = vld [vmem:[%s0 + $0x18] sm:$0xff]
  %v48 = vmax.f32 %v44, 0.0
  %v49 = vmax.f32 %v45, 0.0
  %v50 = vmax.f32 %v46, 0.0
  %v51 = vmax.f32 %v47, 0.0
  %52 = vst.msk [vmem:[#allocation2 + $0x1] sm:$0xff] %vm36, %v48
  %53 = vst.msk [vmem:[#allocation2 + $0x9] sm:$0xff] %vm36, %v49
  %54 = vst.msk [vmem:[#allocation2 + $0x19] sm:$0xff] %vm36, %v50
  %55 = vst.msk [vmem:[#allocation2 + $0x21] sm:$0xff] %vm36, %v51
  %v56 = vld [vmem:[#allocation2] sm:$0xff]
  %v57 = vld [vmem:[#allocation2 + $0x8] sm:$0xff]
  %v58 = vld [vmem:[#allocation2 + $0x10] sm:$0x3]
  %v59 = vld [vmem:[#allocation2 + $0x18] sm:$0xff]
  %v60 = vld [vmem:[#allocation2 + $0x20] sm:$0xff]
  %v61 = vld [vmem:[#allocation2 + $0x28] sm:$0x3]
  %v62 = vld [vmem:[%s2] sm:$0xff]
  %v63 = vld [vmem:[%s2 + $0x8] sm:$0x1]
  %70 = vrot.lane.b32.xlu0 %v56, 4
  %v71 = vpop.permute.xlu0 %70
  %72 = vrot.lane.b32.xlu0 %v57, 4
  %v73 = vpop.permute.xlu0 %72
  %74 = vrot.lane.b32.xlu0 %v58, 4
  %v75 = vpop.permute.xlu0 %74
  %76 = vrot.lane.b32.xlu0 %v59, 4
  %v77 = vpop.permute.xlu0 %76
  %78 = vrot.lane.b32.xlu0 %v60, 4
  %v79 = vpop.permute.xlu0 %78
  %80 = vrot.lane.b32.xlu0 %v61, 4
  %v81 = vpop.permute.xlu0 %80
  %vm88 = vcmask 31744
  %v89 = vsel %vm88, 0.0, %v71
  %v90 = vsel %vm88, 0.0, %v73
  %v91 = vsel %vm88, 0.0, %v75
  %v92 = vsel %vm88, 0.0, %v77
  %v93 = vsel %vm88, 0.0, %v79
  %v94 = vsel %vm88, 0.0, %v81
  %95 = vrot.lane.b32.xlu0 %v56, 124
  %v96 = vpop.permute.xlu0 %95
  %97 = vrot.lane.b32.xlu0 %v57, 124
  %v98 = vpop.permute.xlu0 %97
  %99 = vrot.lane.b32.xlu0 %v58, 124
  %v100 = vpop.permute.xlu0 %99
  %101 = vrot.lane.b32.xlu0 %v59, 124
  %v102 = vpop.permute.xlu0 %101
  %103 = vrot.lane.b32.xlu0 %v60, 124
  %v104 = vpop.permute.xlu0 %103
  %105 = vrot.lane.b32.xlu0 %v61, 124
  %v106 = vpop.permute.xlu0 %105
  %vm113 = vcmask 490496
  %v114 = vsel %vm113, %v96, 0.0
  %v115 = vsel %vm113, %v98, 0.0
  %v116 = vsel %vm113, %v100, 0.0
  %v117 = vsel %vm113, %v102, 0.0
  %v118 = vsel %vm113, %v104, 0.0
  %v119 = vsel %vm113, %v106, 0.0
  %v120 = vlaneseq
  %v121 = vshrl.u32 %v120, 7
  %v122 = vsub.s32 0, %v121
  %v123 = vrot.slane %v62, %v122
  %v124 = vmul.f32 %v89, %v123
  %v125 = vmul.f32 %v90, %v123
  %v126 = vmul.f32 %v92, %v123
  %v127 = vmul.f32 %v93, %v123
  %v128 = vlaneseq
  %v129 = vshrl.u32 %v128, 7
  %v130 = vsub.s32 1, %v129
  %v131 = vrot.slane %v62, %v130
  %v132 = vmul.f32 %v56, %v131
  %v133 = vmul.f32 %v57, %v131
  %v134 = vmul.f32 %v59, %v131
  %v135 = vmul.f32 %v60, %v131
  %v136 = vlaneseq
  %v137 = vshrl.u32 %v136, 7
  %v138 = vsub.s32 2, %v137
  %v139 = vrot.slane %v62, %v138
  %v140 = vmul.f32 %v114, %v139
  %v141 = vmul.f32 %v115, %v139
  %v142 = vmul.f32 %v117, %v139
  %v143 = vmul.f32 %v118, %v139
  %v144 = vlaneseq
  %v145 = vshrl.u32 %v144, 7
  %v146 = vsub.s32 3, %v145
  %v147 = vrot.slane %v62, %v146
  %v148 = vmul.f32 %v89, %v147
  %v149 = vmul.f32 %v90, %v147
  %v150 = vmul.f32 %v91, %v147
  %v151 = vmul.f32 %v92, %v147
  %v152 = vmul.f32 %v93, %v147
  %v153 = vmul.f32 %v94, %v147
  %v154 = vlaneseq
  %v155 = vshrl.u32 %v154, 7
  %v156 = vsub.s32 4, %v155
  %v157 = vrot.slane %v62, %v156
  %v158 = vmul.f32 %v56, %v157
  %v159 = vmul.f32 %v57, %v157
  %v160 = vmul.f32 %v58, %v157
  %v161 = vmul.f32 %v59, %v157
  %v162 = vmul.f32 %v60, %v157
  %v163 = vmul.f32 %v61, %v157
  %v164 = vlaneseq
  %v165 = vshrl.u32 %v164, 7
  %v166 = vsub.s32 5, %v165
  %v167 = vrot.slane %v62, %v166
  %v168 = vmul.f32 %v114, %v167
  %v169 = vmul.f32 %v115, %v167
  %v170 = vmul.f32 %v116, %v167
  %v171 = vmul.f32 %v117, %v167
  %v172 = vmul.f32 %v118, %v167
  %v173 = vmul.f32 %v119, %v167
  %v174 = vlaneseq
  %v175 = vshrl.u32 %v174, 7
  %v176 = vsub.s32 6, %v175
  %v177 = vrot.slane %v62, %v176
  %v178 = vmul.f32 %v89, %v177
  %v179 = vmul.f32 %v90, %v177
  %v180 = vmul.f32 %v91, %v177
  %v181 = vmul.f32 %v92, %v177
  %v182 = vmul.f32 %v93, %v177
  %v183 = vmul.f32 %v94, %v177
  %v184 = vlaneseq
  %v185 = vshrl.u32 %v184, 7
  %v186 = vsub.s32 7, %v185
  %v187 = vrot.slane %v62, %v186
  %v188 = vmul.f32 %v56, %v187
  %v189 = vmul.f32 %v57, %v187
  %v190 = vmul.f32 %v58, %v187
  %v191 = vmul.f32 %v59, %v187
  %v192 = vmul.f32 %v60, %v187
  %v193 = vmul.f32 %v61, %v187
  %v194 = vlaneseq
  %v195 = vshrl.u32 %v194, 7
  %v196 = vsub.s32 0, %v195
  %v197 = vrot.slane %v63, %v196
  %v198 = vmul.f32 %v114, %v197
  %v199 = vmul.f32 %v115, %v197
  %v200 = vmul.f32 %v116, %v197
  %v201 = vmul.f32 %v117, %v197
  %v202 = vmul.f32 %v118, %v197
  %v203 = vmul.f32 %v119, %v197
  %v204 = vadd.f32 %v124, %v132
  %v205 = vadd.f32 %v125, %v133
  %v206 = vadd.f32 %v126, %v134
  %v207 = vadd.f32 %v127, %v135
  %vm214 = vcmask 1046528
  %v215 = vrot.slane %v148, 1
  %v216 = vrot.slane %v149, 1
  %v217 = vsel %vm214, %v215, %v216
  %v218 = vrot.slane %v150, 1
  %v219 = vsel %vm214, %v216, %v218
  %v220 = vrot.slane %v151, 1
  %v221 = vrot.slane %v152, 1
  %v222 = vsel %vm214, %v220, %v221
  %v223 = vrot.slane %v153, 1
  %v224 = vsel %vm214, %v221, %v223
  %v229 = vadd.f32 %v140, %v217
  %v230 = vadd.f32 %v141, %v219
  %v231 = vadd.f32 %v142, %v222
  %v232 = vadd.f32 %v143, %v224
  %v233 = vadd.f32 %v158, %v168
  %v234 = vadd.f32 %v159, %v169
  %v235 = vadd.f32 %v160, %v170
  %v236 = vadd.f32 %v161, %v171
  %v237 = vadd.f32 %v162, %v172
  %v238 = vadd.f32 %v163, %v173
  %v239 = vadd.f32 %v178, %v188
  %v240 = vadd.f32 %v179, %v189
  %v241 = vadd.f32 %v180, %v190
  %v242 = vadd.f32 %v181, %v191
  %v243 = vadd.f32 %v182, %v192
  %v244 = vadd.f32 %v183, %v193
  %v245 = vadd.f32 %v204, %v229
  %v246 = vadd.f32 %v205, %v230
  %v247 = vadd.f32 %v206, %v231
  %v248 = vadd.f32 %v207, %v232
  %v255 = vrot.slane %v239, 1
  %v256 = vrot.slane %v240, 1
  %v257 = vsel %vm214, %v255, %v256
  %v258 = vrot.slane %v241, 1
  %v259 = vsel %vm214, %v256, %v258
  %v260 = vrot.slane %v242, 1
  %v261 = vrot.slane %v243, 1
  %v262 = vsel %vm214, %v260, %v261
  %v263 = vrot.slane %v244, 1
  %v264 = vsel %vm214, %v261, %v263
  %v271 = vadd.f32 %v233, %v257
  %v272 = vadd.f32 %v234, %v259
  %v273 = vadd.f32 %v235, %v258
  %v274 = vadd.f32 %v236, %v262
  %v275 = vadd.f32 %v237, %v264
  %v276 = vadd.f32 %v238, %v263
  %v283 = vrot.slane %v271, 1
  %v284 = vrot.slane %v272, 1
  %v285 = vsel %vm214, %v283, %v284
  %v286 = vrot.slane %v273, 1
  %v287 = vsel %vm214, %v284, %v286
  %v288 = vrot.slane %v274, 1
  %v289 = vrot.slane %v275, 1
  %v290 = vsel %vm214, %v288, %v289
  %v291 = vrot.slane %v276, 1
  %v292 = vsel %vm214, %v289, %v291
  %v297 = vadd.f32 %v245, %v285
  %v298 = vadd.f32 %v246, %v287
  %v299 = vadd.f32 %v247, %v290
  %v300 = vadd.f32 %v248, %v292
  %vm307 = vcmask 1045504
  %v308 = vrot.slane %v198, 2
  %v309 = vrot.slane %v199, 2
  %v310 = vsel %vm307, %v308, %v309
  %v311 = vrot.slane %v200, 2
  %v312 = vsel %vm307, %v309, %v311
  %v313 = vrot.slane %v201, 2
  %v314 = vrot.slane %v202, 2
  %v315 = vsel %vm307, %v313, %v314
  %v316 = vrot.slane %v203, 2
  %v317 = vsel %vm307, %v314, %v316
  %v322 = vadd.f32 %v297, %v310
  %v323 = vadd.f32 %v298, %v312
  %v324 = vadd.f32 %v299, %v315
  %v325 = vadd.f32 %v300, %v317
  %v326 = vpack.c.bf16 %v323, %v322
  %v327 = vpack.c.bf16 %v325, %v324
  %v328 = vld [vmem:[%s3] sm:$0xf]
  %v329 = vld [vmem:[%s3 + $0x4] sm:$0xf]
  %v330 = vld [vmem:[%s3 + $0x8] sm:$0xf]
  %v331 = vld [vmem:[%s3 + $0xc] sm:$0xf]
  %v332 = vld [vmem:[%s3 + $0x10] sm:$0xf]
  %v333 = vld [vmem:[%s3 + $0x14] sm:$0xf]
  %v334 = vld [vmem:[%s3 + $0x18] sm:$0xf]
  %v335 = vld [vmem:[%s3 + $0x1c] sm:$0xf]
  %v336 = vld [vmem:[%s4] sm:$0x1]
  %v338 = vlaneseq
  %v339 = vshrl.u32 %v338, 7
  %v340 = vsub.s32 0, %v339
  %v341 = vrot.slane %v336, %v340
  %v351 = vunpack.c.l.b16 %v328
  %v352 = vunpack.c.l.b16 %v329
  %v353 = vunpack.c.l.b16 %v330
  %v354 = vunpack.c.l.b16 %v331
  %v355 = vunpack.c.l.b16 %v332
  %v356 = vunpack.c.l.b16 %v333
  %v357 = vunpack.c.l.b16 %v334
  %v358 = vunpack.c.l.b16 %v335
  %v359 = vpack.c.b16 %v352, %v351
  %v360 = vpack.c.b16 %v354, %v353
  %v361 = vpack.c.b16 %v356, %v355
  %v362 = vpack.c.b16 %v358, %v357
  %v368 = vsel %vm36, %v326, 0
  %v371 = vsel %vm36, %v327, 0
  %373 = vmatprep.subr.bf16.mxu0 0
  %374 = vmatpush1.bf16.msra.mxu0 %v359
  %375 = vmatprep.subr.bf16.mxu0 0
  %376 = vmatpush1.bf16.msra.mxu0 %v360
  %377 = vmatprep.subr.bf16.mxu0 0
  %378 = vmatpush1.bf16.msra.mxu0 %v361
  %379 = vmatprep.subr.bf16.mxu0 0
  %380 = vmatpush1.bf16.msra.mxu0 %v362
  %381 = vmatprep.subr.bf16.mxu0 0
  %382 = vmatpush1.bf16.msra.mxu0 0
  %383 = vmatprep.subr.bf16.mxu0 0
  %384 = vmatpush1.bf16.msra.mxu0 0
  %385 = vmatprep.subr.bf16.mxu0 0
  %386 = vmatpush1.bf16.msra.mxu0 0
  %387 = vmatprep.subr.bf16.mxu0 0
  %388 = vmatpush1.bf16.msra.mxu0 0
  %389 = vmatprep.subr.bf16.mxu0 0
  %390 = vmatpush1.bf16.msra.mxu0 0
  %391 = vmatprep.subr.bf16.mxu0 0
  %392 = vmatpush1.bf16.msra.mxu0 0
  %393 = vmatprep.subr.bf16.mxu0 0
  %394 = vmatpush1.bf16.msra.mxu0 0
  %395 = vmatprep.subr.bf16.mxu0 0
  %396 = vmatpush1.bf16.msra.mxu0 0
  %397 = vmatprep.subr.bf16.mxu0 0
  %398 = vmatpush1.bf16.msra.mxu0 0
  %399 = vmatprep.subr.bf16.mxu0 0
  %400 = vmatpush1.bf16.msra.mxu0 0
  %401 = vmatprep.subr.bf16.mxu0 0
  %402 = vmatpush1.bf16.msra.mxu0 0
  %403 = vmatprep.subr.bf16.mxu0 0
  %404 = vmatpush1.bf16.msra.mxu0 0
  %405 = vmatprep.mubr.bf16.mxu0 0
  %406 = vmatmul.mubr.bf16.gmra.mrb[0].mxu0 %v368
  %v407 = vpop.f32.mrb[0].mxu0
  %v408 = vadd.f32 %v341, %v407
  %v409 = vpop.f32.mrb[0].mxu0
  %v410 = vpop.f32.mrb[0].mxu0
  %v411 = vadd.f32 %v341, %v410
  %v412 = vpop.f32.mrb[0].mxu0
  %413 = vmatprep.mubr.bf16.mxu0 0
  %414 = vmatmul.mubr.bf16.gmra.mrb[0].mxu0 %v371
  %v415 = vpop.f32.mrb[0].mxu0
  %v416 = vadd.f32 %v341, %v415
  %v417 = vpop.f32.mrb[0].mxu0
  %v418 = vpop.f32.mrb[0].mxu0
  %v419 = vadd.f32 %v341, %v418
  %v420 = vpop.f32.mrb[0].mxu0
  %421 = vdwg.mxu0
  %422 = vst [vmem:[#allocation3] sm:$0xff] 0.0
  %423 = vst [vmem:[#allocation3 + $0x8] sm:$0xff] 0.0
  %424 = vst [vmem:[#allocation3 + $0x10] sm:$0x3] 0.0
  %425 = vst [vmem:[#allocation3 + $0x18] sm:$0xff] 0.0
  %426 = vst [vmem:[#allocation3 + $0x20] sm:$0xff] 0.0
  %427 = vst [vmem:[#allocation3 + $0x28] sm:$0x3] 0.0
  %v428 = vmax.f32 %v408, 0.0
  %v429 = vmax.f32 %v411, 0.0
  %v430 = vmax.f32 %v416, 0.0
  %v431 = vmax.f32 %v419, 0.0
  %432 = vst [vmem:[#allocation3 + $0x1] sm:$0xff] %v428
  %433 = vst [vmem:[#allocation3 + $0x9] sm:$0xff] %v429
  %434 = vst [vmem:[#allocation3 + $0x19] sm:$0xff] %v430
  %435 = vst [vmem:[#allocation3 + $0x21] sm:$0xff] %v431
  %v436 = vld [vmem:[#allocation3] sm:$0xff]
  %v437 = vld [vmem:[#allocation3 + $0x8] sm:$0xff]
  %v438 = vld [vmem:[#allocation3 + $0x10] sm:$0x3]
  %v439 = vld [vmem:[#allocation3 + $0x18] sm:$0xff]
  %v440 = vld [vmem:[#allocation3 + $0x20] sm:$0xff]
  %v441 = vld [vmem:[#allocation3 + $0x28] sm:$0x3]
  %v442 = vld [vmem:[%s5] sm:$0xff]
  %v443 = vld [vmem:[%s5 + $0x8] sm:$0x1]
  %450 = vrot.lane.b32.xlu0 %v436, 8
  %v451 = vpop.permute.xlu0 %450
  %452 = vrot.lane.b32.xlu0 %v437, 8
  %v453 = vpop.permute.xlu0 %452
  %454 = vrot.lane.b32.xlu0 %v438, 8
  %v455 = vpop.permute.xlu0 %454
  %456 = vrot.lane.b32.xlu0 %v439, 8
  %v457 = vpop.permute.xlu0 %456
  %458 = vrot.lane.b32.xlu0 %v440, 8
  %v459 = vpop.permute.xlu0 %458
  %460 = vrot.lane.b32.xlu0 %v441, 8
  %v461 = vpop.permute.xlu0 %460
  %vm468 = vcmask 64512
  %v469 = vsel %vm468, 0.0, %v451
  %v470 = vsel %vm468, 0.0, %v453
  %v471 = vsel %vm468, 0.0, %v455
  %v472 = vsel %vm468, 0.0, %v457
  %v473 = vsel %vm468, 0.0, %v459
  %v474 = vsel %vm468, 0.0, %v461
  %475 = vrot.lane.b32.xlu0 %v436, 120
  %v476 = vpop.permute.xlu0 %475
  %477 = vrot.lane.b32.xlu0 %v437, 120
  %v478 = vpop.permute.xlu0 %477
  %479 = vrot.lane.b32.xlu0 %v438, 120
  %v480 = vpop.permute.xlu0 %479
  %481 = vrot.lane.b32.xlu0 %v439, 120
  %v482 = vpop.permute.xlu0 %481
  %483 = vrot.lane.b32.xlu0 %v440, 120
  %v484 = vpop.permute.xlu0 %483
  %485 = vrot.lane.b32.xlu0 %v441, 120
  %v486 = vpop.permute.xlu0 %485
  %vm493 = vcmask 982016
  %v494 = vsel %vm493, %v476, 0.0
  %v495 = vsel %vm493, %v478, 0.0
  %v496 = vsel %vm493, %v480, 0.0
  %v497 = vsel %vm493, %v482, 0.0
  %v498 = vsel %vm493, %v484, 0.0
  %v499 = vsel %vm493, %v486, 0.0
  %v500 = vlaneseq
  %v501 = vshrl.u32 %v500, 7
  %v502 = vsub.s32 0, %v501
  %v503 = vrot.slane %v442, %v502
  %v504 = vmul.f32 %v469, %v503
  %v505 = vmul.f32 %v470, %v503
  %v506 = vmul.f32 %v472, %v503
  %v507 = vmul.f32 %v473, %v503
  %v508 = vlaneseq
  %v509 = vshrl.u32 %v508, 7
  %v510 = vsub.s32 1, %v509
  %v511 = vrot.slane %v442, %v510
  %v512 = vmul.f32 %v436, %v511
  %v513 = vmul.f32 %v437, %v511
  %v514 = vmul.f32 %v439, %v511
  %v515 = vmul.f32 %v440, %v511
  %v516 = vlaneseq
  %v517 = vshrl.u32 %v516, 7
  %v518 = vsub.s32 2, %v517
  %v519 = vrot.slane %v442, %v518
  %v520 = vmul.f32 %v494, %v519
  %v521 = vmul.f32 %v495, %v519
  %v522 = vmul.f32 %v497, %v519
  %v523 = vmul.f32 %v498, %v519
  %v524 = vlaneseq
  %v525 = vshrl.u32 %v524, 7
  %v526 = vsub.s32 3, %v525
  %v527 = vrot.slane %v442, %v526
  %v528 = vmul.f32 %v469, %v527
  %v529 = vmul.f32 %v470, %v527
  %v530 = vmul.f32 %v471, %v527
  %v531 = vmul.f32 %v472, %v527
  %v532 = vmul.f32 %v473, %v527
  %v533 = vmul.f32 %v474, %v527
  %v534 = vlaneseq
  %v535 = vshrl.u32 %v534, 7
  %v536 = vsub.s32 4, %v535
  %v537 = vrot.slane %v442, %v536
  %v538 = vmul.f32 %v436, %v537
  %v539 = vmul.f32 %v437, %v537
  %v540 = vmul.f32 %v438, %v537
  %v541 = vmul.f32 %v439, %v537
  %v542 = vmul.f32 %v440, %v537
  %v543 = vmul.f32 %v441, %v537
  %v544 = vlaneseq
  %v545 = vshrl.u32 %v544, 7
  %v546 = vsub.s32 5, %v545
  %v547 = vrot.slane %v442, %v546
  %v548 = vmul.f32 %v494, %v547
  %v549 = vmul.f32 %v495, %v547
  %v550 = vmul.f32 %v496, %v547
  %v551 = vmul.f32 %v497, %v547
  %v552 = vmul.f32 %v498, %v547
  %v553 = vmul.f32 %v499, %v547
  %v554 = vlaneseq
  %v555 = vshrl.u32 %v554, 7
  %v556 = vsub.s32 6, %v555
  %v557 = vrot.slane %v442, %v556
  %v558 = vmul.f32 %v469, %v557
  %v559 = vmul.f32 %v470, %v557
  %v560 = vmul.f32 %v471, %v557
  %v561 = vmul.f32 %v472, %v557
  %v562 = vmul.f32 %v473, %v557
  %v563 = vmul.f32 %v474, %v557
  %v564 = vlaneseq
  %v565 = vshrl.u32 %v564, 7
  %v566 = vsub.s32 7, %v565
  %v567 = vrot.slane %v442, %v566
  %v568 = vmul.f32 %v436, %v567
  %v569 = vmul.f32 %v437, %v567
  %v570 = vmul.f32 %v438, %v567
  %v571 = vmul.f32 %v439, %v567
  %v572 = vmul.f32 %v440, %v567
  %v573 = vmul.f32 %v441, %v567
  %v574 = vlaneseq
  %v575 = vshrl.u32 %v574, 7
  %v576 = vsub.s32 0, %v575
  %v577 = vrot.slane %v443, %v576
  %v578 = vmul.f32 %v494, %v577
  %v579 = vmul.f32 %v495, %v577
  %v580 = vmul.f32 %v496, %v577
  %v581 = vmul.f32 %v497, %v577
  %v582 = vmul.f32 %v498, %v577
  %v583 = vmul.f32 %v499, %v577
  %v584 = vadd.f32 %v504, %v512
  %v585 = vadd.f32 %v505, %v513
  %v586 = vadd.f32 %v506, %v514
  %v587 = vadd.f32 %v507, %v515
  %v594 = vrot.slane %v528, 1
  %v595 = vrot.slane %v529, 1
  %v596 = vsel %vm214, %v594, %v595
  %v597 = vrot.slane %v530, 1
  %v598 = vsel %vm214, %v595, %v597
  %v599 = vrot.slane %v531, 1
  %v600 = vrot.slane %v532, 1
  %v601 = vsel %vm214, %v599, %v600
  %v602 = vrot.slane %v533, 1
  %v603 = vsel %vm214, %v600, %v602
  %v608 = vadd.f32 %v520, %v596
  %v609 = vadd.f32 %v521, %v598
  %v610 = vadd.f32 %v522, %v601
  %v611 = vadd.f32 %v523, %v603
  %v612 = vadd.f32 %v538, %v548
  %v613 = vadd.f32 %v539, %v549
  %v614 = vadd.f32 %v540, %v550
  %v615 = vadd.f32 %v541, %v551
  %v616 = vadd.f32 %v542, %v552
  %v617 = vadd.f32 %v543, %v553
  %v618 = vadd.f32 %v558, %v568
  %v619 = vadd.f32 %v559, %v569
  %v620 = vadd.f32 %v560, %v570
  %v621 = vadd.f32 %v561, %v571
  %v622 = vadd.f32 %v562, %v572
  %v623 = vadd.f32 %v563, %v573
  %v624 = vadd.f32 %v584, %v608
  %v625 = vadd.f32 %v585, %v609
  %v626 = vadd.f32 %v586, %v610
  %v627 = vadd.f32 %v587, %v611
  %v634 = vrot.slane %v618, 1
  %v635 = vrot.slane %v619, 1
  %v636 = vsel %vm214, %v634, %v635
  %v637 = vrot.slane %v620, 1
  %v638 = vsel %vm214, %v635, %v637
  %v639 = vrot.slane %v621, 1
  %v640 = vrot.slane %v622, 1
  %v641 = vsel %vm214, %v639, %v640
  %v642 = vrot.slane %v623, 1
  %v643 = vsel %vm214, %v640, %v642
  %v650 = vadd.f32 %v612, %v636
  %v651 = vadd.f32 %v613, %v638
  %v652 = vadd.f32 %v614, %v637
  %v653 = vadd.f32 %v615, %v641
  %v654 = vadd.f32 %v616, %v643
  %v655 = vadd.f32 %v617, %v642
  %v662 = vrot.slane %v650, 1
  %v663 = vrot.slane %v651, 1
  %v664 = vsel %vm214, %v662, %v663
  %v665 = vrot.slane %v652, 1
  %v666 = vsel %vm214, %v663, %v665
  %v667 = vrot.slane %v653, 1
  %v668 = vrot.slane %v654, 1
  %v669 = vsel %vm214, %v667, %v668
  %v670 = vrot.slane %v655, 1
  %v671 = vsel %vm214, %v668, %v670
  %v676 = vadd.f32 %v624, %v664
  %v677 = vadd.f32 %v625, %v666
  %v678 = vadd.f32 %v626, %v669
  %v679 = vadd.f32 %v627, %v671
  %v686 = vrot.slane %v578, 2
  %v687 = vrot.slane %v579, 2
  %v688 = vsel %vm307, %v686, %v687
  %v689 = vrot.slane %v580, 2
  %v690 = vsel %vm307, %v687, %v689
  %v691 = vrot.slane %v581, 2
  %v692 = vrot.slane %v582, 2
  %v693 = vsel %vm307, %v691, %v692
  %v694 = vrot.slane %v583, 2
  %v695 = vsel %vm307, %v692, %v694
  %v700 = vadd.f32 %v676, %v688
  %v701 = vadd.f32 %v677, %v690
  %v702 = vadd.f32 %v678, %v693
  %v703 = vadd.f32 %v679, %v695
  %v704 = vpack.c.bf16 %v701, %v700
  %v705 = vpack.c.bf16 %v703, %v702
  %v706 = vld [vmem:[%s6] sm:$0xf]
  %v707 = vld [vmem:[%s6 + $0x4] sm:$0xf]
  %v708 = vld [vmem:[%s6 + $0x8] sm:$0xf]
  %v709 = vld [vmem:[%s6 + $0xc] sm:$0xf]
  %v710 = vld [vmem:[%s6 + $0x10] sm:$0xf]
  %v711 = vld [vmem:[%s6 + $0x14] sm:$0xf]
  %v712 = vld [vmem:[%s6 + $0x18] sm:$0xf]
  %v713 = vld [vmem:[%s6 + $0x1c] sm:$0xf]
  %v714 = vld [vmem:[%s6 + $0x20] sm:$0xf]
  %v715 = vld [vmem:[%s6 + $0x24] sm:$0xf]
  %v716 = vld [vmem:[%s6 + $0x28] sm:$0xf]
  %v717 = vld [vmem:[%s6 + $0x2c] sm:$0xf]
  %v718 = vld [vmem:[%s6 + $0x30] sm:$0xf]
  %v719 = vld [vmem:[%s6 + $0x34] sm:$0xf]
  %v720 = vld [vmem:[%s6 + $0x38] sm:$0xf]
  %v721 = vld [vmem:[%s6 + $0x3c] sm:$0xf]
  %v722 = vld [vmem:[%s7] sm:$0x1]
  %v724 = vlaneseq
  %v725 = vshrl.u32 %v724, 7
  %v726 = vsub.s32 0, %v725
  %v727 = vrot.slane %v722, %v726
  %v745 = vunpack.c.l.b16 %v706
  %v746 = vunpack.c.l.b16 %v707
  %v747 = vunpack.c.l.b16 %v708
  %v748 = vunpack.c.l.b16 %v709
  %v749 = vunpack.c.l.b16 %v710
  %v750 = vunpack.c.l.b16 %v711
  %v751 = vunpack.c.l.b16 %v712
  %v752 = vunpack.c.l.b16 %v713
  %v753 = vunpack.c.l.b16 %v714
  %v754 = vunpack.c.l.b16 %v715
  %v755 = vunpack.c.l.b16 %v716
  %v756 = vunpack.c.l.b16 %v717
  %v757 = vunpack.c.l.b16 %v718
  %v758 = vunpack.c.l.b16 %v719
  %v759 = vunpack.c.l.b16 %v720
  %v760 = vunpack.c.l.b16 %v721
  %v761 = vpack.c.b16 %v746, %v745
  %v762 = vpack.c.b16 %v748, %v747
  %v763 = vpack.c.b16 %v750, %v749
  %v764 = vpack.c.b16 %v752, %v751
  %v765 = vpack.c.b16 %v754, %v753
  %v766 = vpack.c.b16 %v756, %v755
  %v767 = vpack.c.b16 %v758, %v757
  %v768 = vpack.c.b16 %v760, %v759
  %777 = vmatprep.subr.bf16.mxu0 0
  %778 = vmatpush1.bf16.msra.mxu0 %v761
  %779 = vmatprep.subr.bf16.mxu0 0
  %780 = vmatpush1.bf16.msra.mxu0 %v762
  %781 = vmatprep.subr.bf16.mxu0 0
  %782 = vmatpush1.bf16.msra.mxu0 %v763
  %783 = vmatprep.subr.bf16.mxu0 0
  %784 = vmatpush1.bf16.msra.mxu0 %v764
  %785 = vmatprep.subr.bf16.mxu0 0
  %786 = vmatpush1.bf16.msra.mxu0 %v765
  %787 = vmatprep.subr.bf16.mxu0 0
  %788 = vmatpush1.bf16.msra.mxu0 %v766
  %789 = vmatprep.subr.bf16.mxu0 0
  %790 = vmatpush1.bf16.msra.mxu0 %v767
  %791 = vmatprep.subr.bf16.mxu0 0
  %792 = vmatpush1.bf16.msra.mxu0 %v768
  %793 = vmatprep.subr.bf16.mxu0 0
  %794 = vmatpush1.bf16.msra.mxu0 0
  %795 = vmatprep.subr.bf16.mxu0 0
  %796 = vmatpush1.bf16.msra.mxu0 0
  %797 = vmatprep.subr.bf16.mxu0 0
  %798 = vmatpush1.bf16.msra.mxu0 0
  %799 = vmatprep.subr.bf16.mxu0 0
  %800 = vmatpush1.bf16.msra.mxu0 0
  %801 = vmatprep.subr.bf16.mxu0 0
  %802 = vmatpush1.bf16.msra.mxu0 0
  %803 = vmatprep.subr.bf16.mxu0 0
  %804 = vmatpush1.bf16.msra.mxu0 0
  %805 = vmatprep.subr.bf16.mxu0 0
  %806 = vmatpush1.bf16.msra.mxu0 0
  %807 = vmatprep.subr.bf16.mxu0 0
  %808 = vmatpush1.bf16.msra.mxu0 0
  %809 = vmatprep.mubr.bf16.mxu0 0
  %810 = vmatmul.mubr.bf16.gmra.mrb[0].mxu0 %v704
  %v811 = vpop.f32.mrb[0].mxu0
  %v812 = vadd.f32 %v727, %v811
  %v813 = vpop.f32.mrb[0].mxu0
  %v814 = vpop.f32.mrb[0].mxu0
  %v815 = vadd.f32 %v727, %v814
  %v816 = vpop.f32.mrb[0].mxu0
  %817 = vmatprep.mubr.bf16.mxu0 0
  %818 = vmatmul.mubr.bf16.gmra.mrb[0].mxu0 %v705
  %v819 = vpop.f32.mrb[0].mxu0
  %v820 = vadd.f32 %v727, %v819
  %v821 = vpop.f32.mrb[0].mxu0
  %v822 = vpop.f32.mrb[0].mxu0
  %v823 = vadd.f32 %v727, %v822
  %v824 = vpop.f32.mrb[0].mxu0
  %825 = vdwg.mxu0
  %830 = vrot.lane.b32.xlu0 %v812, 72
  %v831 = vpop.permute.xlu0 %830
  %832 = vrot.lane.b32.xlu0 %v815, 72
  %v833 = vpop.permute.xlu0 %832
  %834 = vrot.lane.b32.xlu0 %v820, 72
  %v835 = vpop.permute.xlu0 %834
  %836 = vrot.lane.b32.xlu0 %v823, 72
  %v837 = vpop.permute.xlu0 %836
  %v842 = vsel %vm468, -inf, %v831
  %v843 = vsel %vm468, -inf, %v833
  %v844 = vsel %vm468, -inf, %v835
  %v845 = vsel %vm468, -inf, %v837
  %846 = vrot.lane.b32.xlu0 %v812, 64
  %v847 = vpop.permute.xlu0 %846
  %848 = vrot.lane.b32.xlu0 %v815, 64
  %v849 = vpop.permute.xlu0 %848
  %850 = vrot.lane.b32.xlu0 %v820, 64
  %v851 = vpop.permute.xlu0 %850
  %852 = vrot.lane.b32.xlu0 %v823, 64
  %v853 = vpop.permute.xlu0 %852
  %v858 = vmax.f32 %v812, %v847
  %v859 = vmax.f32 %v815, %v849
  %v860 = vmax.f32 %v820, %v851
  %v861 = vmax.f32 %v823, %v853
  %v862 = vmax.f32 %v858, %v842
  %v863 = vmax.f32 %v859, %v843
  %v864 = vmax.f32 %v860, %v844
  %v865 = vmax.f32 %v861, %v845
  %866 = vst.msk [vmem:[#allocation4] sm:$0xff] %vm36, %v862
  %867 = vst.msk [vmem:[#allocation4 + $0x8] sm:$0xff] %vm36, %v863
  %868 = vst.msk [vmem:[#allocation4 + $0x10] sm:$0xff] %vm36, %v864
  %869 = vst.msk [vmem:[#allocation4 + $0x18] sm:$0xff] %vm36, %v865
  %v870 = vld [vmem:[#allocation4] ss:$2 sm:$0xff]
  %s871 = scalar_lea.vmem [#allocation4], 16
  %v872 = vld [vmem:[%s871] ss:$2 sm:$0xff]
  %s873 = scalar_lea.vmem [#allocation4], 1
  %v874 = vld [vmem:[%s873] ss:$2 sm:$0xff]
  %s875 = scalar_lea.vmem [#allocation4], 17
  %v876 = vld [vmem:[%s875] ss:$2 sm:$0xff]
  %vm879 = vcmask 1040384
  %v880 = vrot.slane %v874, 7
  %v881 = vrot.slane %v876, 7
  %v882 = vsel %vm879, %v880, %v881
  %v885 = vsel %vm879, %v874, %v880
  %v886 = vlaneseq
  %v887 = vshrl.u32 %v886, 7
  %v888 = vadd.s32 %v887, 8
  %vm889 = vcmp.lt.s32.totalorder %v887, 0
  %v890 = vsub.s32 0, %v887
  %v891 = vsel %vm889, %v890, %v887
  %v892 = vshrl.u32 %v891, 3
  %v893 = vand.u32 %v891, 7
  %v894 = vsub.s32 0, %v893
  %v895 = vsel %vm889, %v894, %v893
  %vm896 = vcmp.lt.s32.totalorder %v888, 0
  %v897 = vsub.s32 0, %v888
  %v898 = vsel %vm896, %v897, %v888
  %v899 = vshrl.u32 %v898, 3
  %v900 = vand.u32 %v898, 7
  %v901 = vsub.s32 0, %v900
  %v902 = vsel %vm896, %v901, %v900
  %vm903 = vcmp.ne.s32.totalorder %v895, 0
  %vm904 = vcmp.ne.s32.totalorder %v902, 0
  %vm905 = vcmp.lt.s32.totalorder %v895, 0
  %vm906 = vcmp.lt.s32.totalorder %v902, 0
  %vm907 = vmand %vm905, %vm903
  %vm908 = vmand %vm906, %vm904
  %v909 = vadd.s32 %v895, 8
  %v910 = vadd.s32 %v902, 8
  %v911 = vsel %vm907, %v909, %v895
  %v912 = vsel %vm908, %v910, %v902
  %vm913 = vcmp.eq.s32.totalorder %v911, 0
  %vm914 = vcmp.eq.s32.totalorder %v912, 0
  %v915 = vsel %vm913, -inf, %v885
  %v916 = vsel %vm914, -inf, %v882
  %v917 = vmax.f32 %v870, %v874
  %v918 = vmax.f32 %v872, %v876
  %v919 = vmax.f32 %v917, %v915
  %v920 = vmax.f32 %v918, %v916
  %v921 = vld [vmem:[%s1] sm:$0xf]
  %v922 = vld [vmem:[%s1 + $0x4] sm:$0xf]
  %v923 = vld [vmem:[%s8] sm:$0xf]
  %v924 = vld [vmem:[%s8 + $0x4] sm:$0xf]
  %v925 = vld [vmem:[%s8 + $0x8] sm:$0xf]
  %v926 = vld [vmem:[%s8 + $0xc] sm:$0xf]
  %v929 = vunpack.c.l.b16 %v921
  %v930 = vunpack.c.l.b16 %v922
  %v931 = vpack.c.b16 %v930, %v929
  %v936 = vunpack.c.l.b16 %v923
  %v937 = vunpack.c.l.b16 %v924
  %v938 = vunpack.c.l.b16 %v925
  %v939 = vunpack.c.l.b16 %v926
  %v940 = vpack.c.b16 %v937, %v936
  %v941 = vpack.c.b16 %v939, %v938
  %vm944 = vcmask 261120
  %v946 = vsel %vm944, %v931, 0
  %948 = vmatprep.subr.bf16.mxu0 0
  %949 = vmatpush1.bf16.msra.mxu0 %v940
  %950 = vmatprep.subr.bf16.mxu0 0
  %951 = vmatpush1.bf16.msra.mxu0 %v941
  %952 = vmatprep.subr.bf16.mxu0 0
  %953 = vmatpush1.bf16.msra.mxu0 0
  %954 = vmatprep.subr.bf16.mxu0 0
  %955 = vmatpush1.bf16.msra.mxu0 0
  %956 = vmatprep.subr.bf16.mxu0 0
  %957 = vmatpush1.bf16.msra.mxu0 0
  %958 = vmatprep.subr.bf16.mxu0 0
  %959 = vmatpush1.bf16.msra.mxu0 0
  %960 = vmatprep.subr.bf16.mxu0 0
  %961 = vmatpush1.bf16.msra.mxu0 0
  %962 = vmatprep.subr.bf16.mxu0 0
  %963 = vmatpush1.bf16.msra.mxu0 0
  %964 = vmatprep.subr.bf16.mxu0 0
  %965 = vmatpush1.bf16.msra.mxu0 0
  %966 = vmatprep.subr.bf16.mxu0 0
  %967 = vmatpush1.bf16.msra.mxu0 0
  %968 = vmatprep.subr.bf16.mxu0 0
  %969 = vmatpush1.bf16.msra.mxu0 0
  %970 = vmatprep.subr.bf16.mxu0 0
  %971 = vmatpush1.bf16.msra.mxu0 0
  %972 = vmatprep.subr.bf16.mxu0 0
  %973 = vmatpush1.bf16.msra.mxu0 0
  %974 = vmatprep.subr.bf16.mxu0 0
  %975 = vmatpush1.bf16.msra.mxu0 0
  %976 = vmatprep.subr.bf16.mxu0 0
  %977 = vmatpush1.bf16.msra.mxu0 0
  %978 = vmatprep.subr.bf16.mxu0 0
  %979 = vmatpush1.bf16.msra.mxu0 0
  %980 = vmatprep.mubr.bf16.mxu0 0
  %981 = vmatmul.mubr.bf16.gmra.mrb[0].mxu0 %v946
  %v982 = vpop.f32.mrb[0].mxu0
  %v983 = vadd.f32 0.0, %v982
  %v984 = vpop.f32.mrb[0].mxu0
  %v985 = vpop.f32.mrb[0].mxu0
  %v986 = vadd.f32 0.0, %v985
  %v987 = vpop.f32.mrb[0].mxu0
  %988 = vdwg.mxu0
  %v989 = vmax.f32 %v983, 0.0
  %v990 = vmax.f32 %v986, 0.0
  %v991 = vld [vmem:[%s9] sm:$0x1]
  %v992 = vlaneseq
  %v993 = vshrl.u32 %v992, 7
  %v994 = vsub.s32 0, %v993
  %v995 = vrot.slane %v991, %v994
  %v996 = vmul.f32 %v989, %v995
  %v997 = vmul.f32 %v990, %v995
  %v998 = vld [vmem:[%s9 + $0x1] sm:$0x1]
  %v999 = vlaneseq
  %v1000 = vshrl.u32 %v999, 7
  %v1001 = vsub.s32 0, %v1000
  %v1002 = vrot.slane %v998, %v1001
  %v1003 = vadd.f32 %v996, %v1002
  %v1004 = vadd.f32 %v997, %v1002
  %v1005 = vadd.f32 %v919, %v1003
  %v1006 = vadd.f32 %v920, %v1004
  %1008 = vrot.lane.b32.xlu0 %v1006, 64
  %v1009 = vpop.permute.xlu0 %1008
  %v1011 = vsel %vm36, %v1005, %v1009
  %1012 = vst [vmem:[%s10] sm:$0xff] %v1011
  // Predicated region
  $region42: #{block_forward.1} parent=0 // pred_check
    _
  $region43: #{block_forward.1} parent=0 // pred_check_branch
    %1014 = sbr.rel (0) target = $region45
  $region44: #{block_forward.1} parent=0 // pred_region
    _
  $region45: #{block_forward.1} parent=0 // pred_fallthru
    _
  // Predicated region
  $region46: #{block_forward.1} parent=0 // pred_check
    _
  $region47: #{block_forward.1} parent=0 // pred_check_branch
    %1016 = sbr.rel (0) target = $region49
  $region48: #{block_forward.1} parent=0 // pred_region
    _
  $region49: #{block_forward.1} parent=0 // pred_fallthru
    _

</llo_original>
